<compile_context>
chip_gen: v7x
topology: tpu7x:2x2x1
jax: 0.10.0
libtpu: 0.0.40
codegen_flags: <defaults>
</compile_context>

<pallas_src>
import jax
import jax.numpy as jnp
from jax.experimental import pallas as pl
from jax.experimental.pallas import tpu as pltpu

# ~2 MiB per block buffer: with double-buffered input + output (~4 large
# buffers) this stays well inside even v5e's 16 MiB default scoped VMEM while
# being large enough (>85% of HBM roofline for a streaming multiply).
_TARGET_BLOCK_BYTES = 2 << 20


def _element_scale_kernel(x_ref, s_ref, o_ref):
    # x_ref: (br, bc) tile, s_ref: (br, 1) per-row scale -> broadcast over lanes.
    o_ref[...] = x_ref[...] * s_ref[...]


def _pick_blocks(R: int, L: int, itemsize: int):
    """Choose (block_rows, block_cols) respecting the (8, 128) tiling rule."""
    # Columns: keep the full row (lane-dense) unless a single 8-row slab would
    # blow the budget AND L tiles cleanly into multiples of 128.
    if L * itemsize * 8 > _TARGET_BLOCK_BYTES and L % 128 == 0:
        bc = (_TARGET_BLOCK_BYTES // (8 * itemsize) // 128) * 128
        bc = int(min(max(128, bc), L))
    else:
        bc = L
    # Rows: biggest multiple of 8 that keeps the block under budget.
    rows_budget = max(1, _TARGET_BLOCK_BYTES // (bc * itemsize))
    if rows_budget >= R:
        br = R  # full extent -> always legal
    else:
        br = int(min(R, max(8, (rows_budget // 8) * 8)))
    return br, bc


def element_scale(x: jax.Array, scale: jax.Array) -> jax.Array:
    """x: (N, C, H, W); scale: (1, C, 1, 1). Returns x * scale (broadcast over N, H, W)."""
    N, C, H, W = x.shape
    assert scale.shape == (1, C, 1, 1)

    R, L = N * C, H * W
    dtype = x.dtype
    itemsize = jnp.dtype(dtype).itemsize

    # Lane-dense 2D view of the big operand.
    x2 = x.reshape(R, L)
    # Per-row scale column (tiny: N*C elements), built once outside the kernel.
    s_row = jnp.broadcast_to(scale.reshape(1, C).astype(dtype), (N, C)).reshape(R, 1)

    br, bc = _pick_blocks(R, L, itemsize)
    grid = (pl.cdiv(R, br), pl.cdiv(L, bc))

    out2 = pl.pallas_call(
        _element_scale_kernel,
        out_shape=jax.ShapeDtypeStruct((R, L), dtype),
        grid_spec=pltpu.PrefetchScalarGridSpec(
            num_scalar_prefetch=0,
            grid=grid,
            in_specs=[
                pl.BlockSpec((br, bc), lambda i, j: (i, j)),
                pl.BlockSpec((br, 1), lambda i, j: (i, 0)),
            ],
            out_specs=pl.BlockSpec((br, bc), lambda i, j: (i, j)),
        ),
        compiler_params=pltpu.CompilerParams(
            dimension_semantics=("parallel", "parallel"),
        ),
    )(x2, s_row)

    return out2.reshape(N, C, H, W)


class ElementScale:
    """JAX/Pallas equivalent of the PyTorch ElementScale module."""

    def __init__(self, embed_dims: int, init_value: float = 0.0):
        # Matches nn.Parameter(init_value * torch.ones((1, C, 1, 1))).
        self.embed_dims = embed_dims
        self.scale = init_value * jnp.ones((1, embed_dims, 1, 1), dtype=jnp.float32)
        self._scale_by_dtype = {}  # cache the cast so it isn't a per-forward op

    def __call__(self, x: jax.Array) -> jax.Array:
        s = self._scale_by_dtype.get(x.dtype)
        if s is None:
            s = self.scale.astype(x.dtype)
            self._scale_by_dtype[x.dtype] = s
        return element_scale(x, s)


# TODO(synk): the rest of GFMN (convs, depthwise convs, pooling, interpolate,
# PixelShuffle, GELU/LayerNorm blocks) is left to XLA; only ElementScale is
# implemented as a standalone Pallas kernel here. For production, this trivial
# bandwidth-bound multiply should ideally be fused into its neighboring ops.


if __name__ == "__main__":
    key = jax.random.PRNGKey(0)

    # Small shape matching the module usage (N, C, H, W).
    N, C, H, W = 2, 4, 16, 16
    x = jax.random.normal(key, (N, C, H, W), dtype=jnp.float32)

    module = ElementScale(embed_dims=C, init_value=0.5)  # non-zero -> non-trivial
    out = jax.block_until_ready(module(x))
    ref = x * module.scale
    assert out.shape == x.shape
    assert jnp.allclose(out, ref, atol=1e-6, rtol=1e-6)

    # Second check: larger shape with a distinct per-channel scale, exercising
    # the multi-block (row-tiled) path and the row-broadcast of the scale.
    key1, key2 = jax.random.split(key)
    N2, C2, H2, W2 = 4, 64, 64, 64
    x_big = jax.random.normal(key1, (N2, C2, H2, W2), dtype=jnp.float32)
    scale_big = jax.random.normal(key2, (1, C2, 1, 1), dtype=jnp.float32)
    out_big = jax.block_until_ready(element_scale(x_big, scale_big))
    ref_big = x_big * scale_big
    assert out_big.shape == x_big.shape
    assert jnp.allclose(out_big, ref_big, atol=1e-6, rtol=1e-6)

    print("KERNEL_OK")
</pallas_src>

<mosaic_0001>
module attributes {stable_mosaic.version = 11 : i64} {
  func.func @_element_scale_kernel(%arg0: i32, %arg1: i32, %arg2: memref<8x256xf32, #tpu.memory_space<vmem>>, %arg3: memref<8x1xf32, #tpu.memory_space<vmem>>, %arg4: memref<8x256xf32, #tpu.memory_space<vmem>>) attributes {dimension_semantics = [#tpu.dimension_semantics<parallel>, #tpu.dimension_semantics<parallel>], iteration_bounds = array<i64: 1, 1>, scalar_prefetch = 0 : i64, scratch_operands = 0 : i64, tpu.core_type = #tpu.core_type<tc>, window_params = [{transform_indices = @transform_0, window_bounds = array<i64: 8, 256>}, {transform_indices = @transform_1, window_bounds = array<i64: 8, 1>}, {transform_indices = @transform_2, window_bounds = array<i64: 8, 256>}]} {
    %c0 = arith.constant 0 : index
    %c0_0 = arith.constant 0 : index
    %0 = vector.load %arg2[%c0, %c0_0] : memref<8x256xf32, #tpu.memory_space<vmem>>, vector<8x256xf32>
    %c0_1 = arith.constant 0 : index
    %c0_2 = arith.constant 0 : index
    %1 = vector.load %arg3[%c0_1, %c0_2] : memref<8x1xf32, #tpu.memory_space<vmem>>, vector<8x1xf32>
    %2 = vector.broadcast %1 : vector<8x1xf32> to vector<8x256xf32>
    %3 = arith.mulf %0, %2 : vector<8x256xf32>
    %c0_3 = arith.constant 0 : index
    %c0_4 = arith.constant 0 : index
    %4 = vector.load %arg4[%c0_3, %c0_4] : memref<8x256xf32, #tpu.memory_space<vmem>>, vector<8x256xf32>
    tpu.vector_store %arg4[%c0_3, %c0_4], %3 {strides = array<i32>} : memref<8x256xf32, #tpu.memory_space<vmem>>, vector<8x256xf32>,
    return
  }
  func.func @transform_0(%arg0: i32, %arg1: i32) -> (i32, i32) {
    %c0_i32 = arith.constant 0 : i32
    return %arg0, %arg1 : i32, i32
  }
  func.func @transform_1(%arg0: i32, %arg1: i32) -> (i32, i32) {
    %c0_i32 = arith.constant 0 : i32
    %c0_i32_0 = arith.constant 0 : i32
    return %arg0, %c0_i32 : i32, i32
  }
  func.func @transform_2(%arg0: i32, %arg1: i32) -> (i32, i32) {
    %c0_i32 = arith.constant 0 : i32
    return %arg0, %arg1 : i32, i32
  }
}

</mosaic_0001>

<llo_original>
// kernel: tpu_custom_call.1
$region0: #{tpu_custom_call.1}
  #allocation0 [shape = 'u32[]', space=smem, size = 0x4, offset = 0x4, fixed_abs, tag = 'smem constant byte address 0x4 - core index']
  #allocation1 [shape = 'u32[144,128]{1,0:T(1,128)}', space=vmem, size = 0x12000, scoped, tag = 'internal scratch']
  %s0 = inlined_call_operand.hbm [shape: f32[8,256], index: 0, kind: input, shape index: {}]
  %s1 = inlined_call_operand.vmem [shape: f32[8,1], index: 1, kind: input, shape index: {}]
  %s2 = inlined_call_operand.hbm [shape: f32[8,256], index: 2, kind: output, shape index: {}]
  %s3 = sld [smem:[#allocation0]]
  $region22: #{tpu_custom_call.1} parent=0
    _
  %s5 = ssub.s32 1, %s3
  %s6 = scalar_select 0, %s5, %s3
  $region1: #{tpu_custom_call.1} parent=0
    #allocation2 [shape = 'u8[8192]{0}', space=vmem, size = 0x2000, scoped, tag = 'input window, operand 0, single buffered']
    #allocation3 [shape = 's32[1]{0}', space=sflag, size = 0x4, scoped, tag = 'scoped memory for tpu_custom_call.1']
    #allocation4 [shape = 's32[1]{0}', space=sflag, size = 0x4, scoped, tag = 'scoped memory for tpu_custom_call.1']
    #allocation5 [shape = 'u8[8192]{0}', space=vmem, size = 0x2000, scoped, tag = 'output window, operand 0, single buffered']
    %7 = vsyncpa [#allocation3], 0
    %8 = vsyncpa [#allocation4], 0
    // Predicated region
    $region2: #{tpu_custom_call.1} parent=1 // pred_check
      _
    $region3: #{tpu_custom_call.1} parent=1 // pred_check_branch
      %10 = sbr.rel (0) target = $region5
    $region4: #{tpu_custom_call.1} parent=1 // pred_region
      %s12 = ssub.s32 256, 256
      %13 = vsyncadd [#allocation3], %s12
      %s15 = sshll.u32 [#allocation2], 4
      %s16 = int_to_ptr.vmem [resolvable:$true] %s15
      %18 = dma.hbm_to_vmem [thread:$0]  %s0, 256, %s16, [#allocation3]
    $region5: #{tpu_custom_call.1} parent=1 // pred_fallthru
      _
    // Predicated region
    $region6: #{tpu_custom_call.1} parent=1 // pred_check
      _
    $region7: #{tpu_custom_call.1} parent=1 // pred_check_branch
      %20 = sbr.rel (0) target = $region9
    $region8: #{tpu_custom_call.1} parent=1 // pred_region
      _
    $region9: #{tpu_custom_call.1} parent=1 // pred_fallthru
      _
    // Predicated region
    $region10: #{tpu_custom_call.1} parent=1 // pred_check
      _
    $region11: #{tpu_custom_call.1} parent=1 // pred_check_branch
      %22 = sbr.rel (0) target = $region13
    $region12: #{tpu_custom_call.1} parent=1 // pred_region
      %23 = dma.done [#allocation3], 256
    $region13: #{tpu_custom_call.1} parent=1 // pred_fallthru
      _
    %v24 = vld [vmem:[#allocation2] sm:$0xff]
    %v25 = vld [vmem:[#allocation2 + $0x8] sm:$0xff]
    %v26 = vld [vmem:[%s1] sm:$0xff]
    %28 = vset.pattern.permute.xlu0 0
    %29 = vperm.xlu0 %28, %v26
    %v30 = vpop.permute.xlu0 %29
    %v32 = vmul.f32 %v24, %v30
    %v33 = vmul.f32 %v25, %v30
    %34 = vst [vmem:[#allocation5] sm:$0xff] %v32
    %35 = vst [vmem:[#allocation5 + $0x8] sm:$0xff] %v33
    // Predicated region
    $region14: #{tpu_custom_call.1} parent=1 // pred_check
      _
    $region15: #{tpu_custom_call.1} parent=1 // pred_check_branch
      %37 = sbr.rel (0) target = $region17
    $region16: #{tpu_custom_call.1} parent=1 // pred_region
      %s39 = ssub.s32 256, 256
      %40 = vsyncadd [#allocation4], %s39
      %s42 = sshll.u32 [#allocation5], 4
      %s43 = int_to_ptr.vmem [resolvable:$true] %s42
      %45 = dma.vmem_to_hbm [thread:$0]  %s43, 256, %s2, [#allocation4]
    $region17: #{tpu_custom_call.1} parent=1 // pred_fallthru
      _
    // Predicated region
    $region18: #{tpu_custom_call.1} parent=1 // pred_check
      _
    $region19: #{tpu_custom_call.1} parent=1 // pred_check_branch
      %47 = sbr.rel (0) target = $region21
    $region20: #{tpu_custom_call.1} parent=1 // pred_region
      %48 = dma.done [#allocation4], 256
    $region21: #{tpu_custom_call.1} parent=1 // pred_fallthru
      _
    %49 = vsyncpa [#allocation3], 1
    %50 = vsyncpa [#allocation4], 1

</llo_original>
